<compile_context>
chip_gen: v7x
topology: tpu7x:2x2x1
jax: 0.10.0
libtpu: 0.0.40
codegen_flags: <defaults>
</compile_context>

<pallas_src>
import functools

import jax
import jax.numpy as jnp
from jax.experimental import pallas as pl
from jax.experimental.pallas import tpu as pltpu

EPS = 1e-5
NEG_SLOPE = 0.01  # F.leaky_relu default


def _leaky_relu(x):
    # Single vmax per vreg (valid since NEG_SLOPE < 1), instead of vcmp+vsel.
    return jnp.maximum(x, NEG_SLOPE * x)


def qnetwork_kernel(state_ref, action_ref, w1_ref, w2x_hbm, w2a_ref, w3_hbm,
                    w4_ref, b4_ref, out_ref, w2x_vmem, w3_vmem, dma_sem,
                    *, lane_dense_out=False):
    # Kick off the big late-layer weight DMAs immediately so the HBM->VMEM
    # transfer of the fc2/fc3 weight tiles overlaps bn0 / fc1 / bn1 compute.
    cp_w2x = pltpu.make_async_copy(w2x_hbm, w2x_vmem, dma_sem.at[0])
    cp_w3 = pltpu.make_async_copy(w3_hbm, w3_vmem, dma_sem.at[1])
    cp_w2x.start()
    cp_w3.start()

    s = state_ref[...]
    a = action_ref[...]
    inv_b = 1.0 / s.shape[0]  # static

    def bn_two_pass(x):
        # Centred statistics: safe for raw RL observations whose features may
        # have |mean| >> std (one-pass E[x^2]-mean^2 would cancel in f32).
        mean = jnp.sum(x, axis=0, keepdims=True) * inv_b
        xc = x - mean
        var = jnp.sum(xc * xc, axis=0, keepdims=True) * inv_b
        return xc * jax.lax.rsqrt(var + EPS)

    def bn(x):
        # One-pass statistics (single read of x, two sublane reductions) with
        # a clamp so f32 cancellation can never push the variance negative.
        s1 = jnp.sum(x, axis=0, keepdims=True)
        s2 = jnp.sum(x * x, axis=0, keepdims=True)
        mean = s1 * inv_b
        var = jnp.maximum(s2 * inv_b - mean * mean, 0.0)
        return (x - mean) * jax.lax.rsqrt(var + EPS)

    def mm(x, w):
        # bf16-stored weights: cast only the (small) activation operand so the
        # MXU consumes native bf16 x bf16 with f32 accumulation.  f32 weights
        # keep an all-f32 matmul.  The weight tile is never repacked on the VPU.
        if w.dtype != x.dtype:
            x = x.astype(w.dtype)
        return jnp.dot(x, w, preferred_element_type=jnp.float32)

    # x = bn0(state)
    x = bn_two_pass(s)

    # x = leaky_relu(bn1(fc1(x)))      (bias b1 cancels under training-mode BN)
    x = _leaky_relu(bn(mm(x, w1_ref[...])))

    # x = cat([x, action]); x = leaky_relu(bn2(fc2(x)))       (bias b2 cancels)
    # fc2(cat(x, a)) == x @ W2x + a @ W2a.  The K=4 action contraction is four
    # broadcast multiply-adds on the VPU (co-issues with the W2x vmatmul)
    # instead of a padded K=4 MXU matmul.
    cp_w2x.wait()
    acc = mm(x, w2x_vmem[...])
    w2a = w2a_ref[...]
    for k in range(a.shape[1]):
        acc = acc + a[:, k:k + 1] * w2a[k:k + 1, :]
    x = _leaky_relu(bn(acc))

    # x = leaky_relu(bn3(fc3(x)))                              (bias b3 cancels)
    cp_w3.wait()
    x = _leaky_relu(bn(mm(x, w3_vmem[...])))

    # x = fc4(x): 128 -> 1.
    b4 = b4_ref[0]
    w4 = w4_ref[...]
    if lane_dense_out:
        # Lane-dense (1, B) output for large batch: contraction over the
        # 128-dim lands directly in an unmasked-store layout (reshaped to
        # (B, 1) in the wrapper).
        q_t = jax.lax.dot_general(w4, x, (((1,), (1,)), ((), ())),
                                  preferred_element_type=jnp.float32)
        out_ref[...] = q_t + b4
    else:
        # Small batch: VPU broadcast multiply + lane reduction; the masked
        # (B, 1) store does not matter at tiny B.
        out_ref[...] = jnp.sum(x * w4, axis=-1, keepdims=True) + b4


def qnetwork_forward(state, action, params, *, lane_dense_output=None):
    """state: (B, S), action: (B, A) -> (B, 1) float32.

    Weights w1 / w2x / w3 may be stored in bf16 (halves weight DMA bytes);
    w2a / w4 / b4 (VPU / scalar paths) are always consumed in f32.
    """
    B = state.shape[0]
    if lane_dense_output is None:
        lane_dense_output = B >= 512  # masked (B,1) stores only hurt at large B

    w1 = params["w1"]
    w2x = params["w2x"]
    w3 = params["w3"]
    w2a = params["w2a"].astype(jnp.float32)
    w4_row = params["w4"].astype(jnp.float32).reshape(1, -1)  # (1, 128)
    b4 = params["b4"].astype(jnp.float32).reshape(1)          # 1-D SMEM scalar

    vmem = pl.BlockSpec(memory_space=pltpu.MemorySpace.VMEM)
    smem = pl.BlockSpec(memory_space=pltpu.MemorySpace.SMEM)
    hbm = pl.BlockSpec(memory_space=pl.ANY)   # manual DMA inside the kernel

    kernel = functools.partial(qnetwork_kernel, lane_dense_out=lane_dense_output)

    out_shape = (jax.ShapeDtypeStruct((1, B), jnp.float32) if lane_dense_output
                 else jax.ShapeDtypeStruct((B, 1), jnp.float32))

    out = pl.pallas_call(
        kernel,
        out_shape=out_shape,
        in_specs=[vmem, vmem, vmem, hbm, vmem, hbm, vmem, smem],
        out_specs=pl.BlockSpec(memory_space=pltpu.MemorySpace.VMEM),
        scratch_shapes=[
            pltpu.VMEM(w2x.shape, w2x.dtype),   # fc2 weight landing buffer
            pltpu.VMEM(w3.shape, w3.dtype),     # fc3 weight landing buffer
            pltpu.SemaphoreType.DMA((2,)),
        ],
    )(state, action, w1, w2x, w2a, w3, w4_row, b4)

    if lane_dense_output:
        out = out.reshape(B, 1)
    return out


def init_params(key, state_dim, action_dim):
    """Deterministic init mimicking the PyTorch module's uniform inits.

    Weights are stored transposed: (in_features, out_features).  hidden_init in
    the reference uses weight.size()[0] == out_features as 'fan_in' (quirk of
    the original code) -> lim = 1/sqrt(out_features).  Biases b1..b3 are
    generated only for the pure-JAX reference (the kernel omits them because
    training-mode BatchNorm cancels them exactly).
    """
    ks = jax.random.split(key, 8)

    def u(k, shape, lim):
        return jax.random.uniform(k, shape, jnp.float32, -lim, lim)

    h1, h2, h3 = 256, 256, 128
    lim1 = 1.0 / jnp.sqrt(h1)
    lim2 = 1.0 / jnp.sqrt(h2)
    lim3 = 1.0 / jnp.sqrt(h3)

    w2_full = u(ks[2], (h1 + action_dim, h2), lim2)  # fc2 weight, transposed
    params = {
        "w1": u(ks[0], (state_dim, h1), lim1),
        "b1": u(ks[1], (1, h1), 1.0 / jnp.sqrt(state_dim)),
        "w2x": w2_full[:h1, :],
        "w2a": w2_full[h1:, :],
        "b2": u(ks[3], (1, h2), 1.0 / jnp.sqrt(h1 + action_dim)),
        "w3": u(ks[4], (h2, h3), lim3),
        "b3": u(ks[5], (1, h3), 1.0 / jnp.sqrt(h2)),
        "w4": u(ks[6], (h3, 1), 0.003),
        "b4": u(ks[7], (1, 1), 1.0 / jnp.sqrt(h3)),
    }
    return params


def ref_forward(s, a, p):
    """Pure-JAX faithful reference (two-pass BN, biases included)."""
    def bn(x):
        m = jnp.mean(x, axis=0, keepdims=True)
        v = jnp.mean((x - m) * (x - m), axis=0, keepdims=True)
        return (x - m) / jnp.sqrt(v + EPS)

    x = bn(s)
    x = _leaky_relu(bn(x @ p["w1"] + p["b1"]))
    x = _leaky_relu(bn(x @ p["w2x"] + a @ p["w2a"] + p["b2"]))
    x = _leaky_relu(bn(x @ p["w3"] + p["b3"]))
    return x @ p["w4"] + p["b4"]


if __name__ == "__main__":
    key = jax.random.PRNGKey(0)
    k_s, k_a, k_p = jax.random.split(key, 3)

    batch = 8          # BatchNorm (training mode) needs batch > 1
    state_dim = 33     # Reacher-style observation size
    action_dim = 4     # Reacher-style action size

    state = jax.random.normal(k_s, (batch, state_dim), jnp.float32)
    action = jax.random.normal(k_a, (batch, action_dim), jnp.float32)
    params = init_params(k_p, state_dim, action_dim)

    ref = ref_forward(state, action, params)

    # Default (f32 weights, (B,1) output) path.
    q = jax.block_until_ready(qnetwork_forward(state, action, params))
    assert q.shape == (batch, 1)
    assert jnp.allclose(q, ref, atol=2e-3, rtol=2e-3), (q, ref)

    # Lane-dense (1,B) output path (perf layout for large B) — same math.
    q_ld = jax.block_until_ready(
        qnetwork_forward(state, action, params, lane_dense_output=True))
    assert q_ld.shape == (batch, 1)
    assert jnp.allclose(q_ld, ref, atol=2e-3, rtol=2e-3), (q_ld, ref)

    # bf16-stored MXU weights (halved weight DMA); looser tolerance.
    p_bf16 = dict(params)
    for name in ("w1", "w2x", "w3"):
        p_bf16[name] = params[name].astype(jnp.bfloat16)
    q_bf = jax.block_until_ready(qnetwork_forward(state, action, p_bf16))
    assert jnp.allclose(q_bf, ref, atol=5e-2, rtol=5e-2), (q_bf, ref)

    print("KERNEL_OK")
</pallas_src>

<mosaic_0001>
module attributes {stable_mosaic.version = 11 : i64} {
  func.func @qnetwork_kernel(%arg0: memref<8x33xf32, #tpu.memory_space<vmem>>, %arg1: memref<8x4xf32, #tpu.memory_space<vmem>>, %arg2: memref<33x256xf32, #tpu.memory_space<vmem>>, %arg3: memref<256x256xf32, #tpu.memory_space<any>>, %arg4: memref<4x256xf32, #tpu.memory_space<vmem>>, %arg5: memref<256x128xf32, #tpu.memory_space<any>>, %arg6: memref<1x128xf32, #tpu.memory_space<vmem>>, %arg7: memref<1xf32, #tpu.memory_space<smem>>, %arg8: memref<8x1xf32, #tpu.memory_space<vmem>>, %arg9: memref<256x256xf32, #tpu.memory_space<vmem>>, %arg10: memref<256x128xf32, #tpu.memory_space<vmem>>, %arg11: memref<2x!tpu.dma_semaphore, #tpu.memory_space<semaphore_mem>>) attributes {dimension_semantics = [], scalar_prefetch = 0 : i64, scratch_operands = 3 : i64, tpu.core_type = #tpu.core_type<tc>} {
    %c0_i32 = arith.constant 0 : i32
    %0 = tpu.memref_slice %arg11[%c0_i32] : memref<2x!tpu.dma_semaphore, #tpu.memory_space<semaphore_mem>> -> memref<1x!tpu.dma_semaphore, #tpu.memory_space<semaphore_mem>>
    %1 = tpu.memref_squeeze %0 : memref<1x!tpu.dma_semaphore, #tpu.memory_space<semaphore_mem>> -> memref<!tpu.dma_semaphore, #tpu.memory_space<semaphore_mem>>
    tpu.enqueue_dma source(%arg3 : memref<256x256xf32, #tpu.memory_space<any>>) target(%arg9 : memref<256x256xf32, #tpu.memory_space<vmem>>) target_semaphore(%1 : memref<!tpu.dma_semaphore, #tpu.memory_space<semaphore_mem>>)
    %c1_i32 = arith.constant 1 : i32
    %2 = tpu.memref_slice %arg11[%c1_i32] : memref<2x!tpu.dma_semaphore, #tpu.memory_space<semaphore_mem>> -> memref<1x!tpu.dma_semaphore, #tpu.memory_space<semaphore_mem>>
    %3 = tpu.memref_squeeze %2 : memref<1x!tpu.dma_semaphore, #tpu.memory_space<semaphore_mem>> -> memref<!tpu.dma_semaphore, #tpu.memory_space<semaphore_mem>>
    tpu.enqueue_dma source(%arg5 : memref<256x128xf32, #tpu.memory_space<any>>) target(%arg10 : memref<256x128xf32, #tpu.memory_space<vmem>>) target_semaphore(%3 : memref<!tpu.dma_semaphore, #tpu.memory_space<semaphore_mem>>)
    %c0 = arith.constant 0 : index
    %c0_0 = arith.constant 0 : index
    %4 = vector.load %arg0[%c0, %c0_0] : memref<8x33xf32, #tpu.memory_space<vmem>>, vector<8x33xf32>
    %c0_1 = arith.constant 0 : index
    %c0_2 = arith.constant 0 : index
    %5 = vector.load %arg1[%c0_1, %c0_2] : memref<8x4xf32, #tpu.memory_space<vmem>>, vector<8x4xf32>
    %cst = arith.constant dense<0.000000e+00> : vector<33xf32>
    %6 = vector.multi_reduction <add>, %4, %cst [0] : vector<8x33xf32> to vector<33xf32>
    %7 = vector.shape_cast %6 : vector<33xf32> to vector<1x33xf32>
    %cst_3 = arith.constant 1.250000e-01 : f32
    %8 = vector.broadcast %cst_3 : f32 to vector<1x33xf32>
    %9 = arith.mulf %7, %8 : vector<1x33xf32>
    %10 = vector.broadcast %9 : vector<1x33xf32> to vector<8x33xf32>
    %11 = arith.subf %4, %10 : vector<8x33xf32>
    %12 = arith.mulf %11, %11 : vector<8x33xf32>
    %cst_4 = arith.constant dense<0.000000e+00> : vector<33xf32>
    %13 = vector.multi_reduction <add>, %12, %cst_4 [0] : vector<8x33xf32> to vector<33xf32>
    %14 = vector.shape_cast %13 : vector<33xf32> to vector<1x33xf32>
    %cst_5 = arith.constant 1.250000e-01 : f32
    %15 = vector.broadcast %cst_5 : f32 to vector<1x33xf32>
    %16 = arith.mulf %14, %15 : vector<1x33xf32>
    %cst_6 = arith.constant 9.99999974E-6 : f32
    %17 = vector.broadcast %cst_6 : f32 to vector<1x33xf32>
    %18 = arith.addf %16, %17 : vector<1x33xf32>
    %19 = math.rsqrt %18 : vector<1x33xf32>
    %20 = vector.broadcast %19 : vector<1x33xf32> to vector<8x33xf32>
    %21 = arith.mulf %11, %20 : vector<8x33xf32>
    %c0_7 = arith.constant 0 : index
    %c0_8 = arith.constant 0 : index
    %22 = vector.load %arg2[%c0_7, %c0_8] : memref<33x256xf32, #tpu.memory_space<vmem>>, vector<33x256xf32>
    %cst_9 = arith.constant dense<0.000000e+00> : vector<8x256xf32>
    %23 = tpu.matmul %21, %22, %cst_9 {dimension_numbers = #tpu.dot_dimension_numbers<[1], [0], [0], [1], [0, 0, 1, 1], [], []>} : vector<8x33xf32>, vector<33x256xf32>, vector<8x256xf32> -> vector<8x256xf32>
    %cst_10 = arith.constant dense<0.000000e+00> : vector<256xf32>
    %24 = vector.multi_reduction <add>, %23, %cst_10 [0] : vector<8x256xf32> to vector<256xf32>
    %25 = vector.shape_cast %24 : vector<256xf32> to vector<1x256xf32>
    %26 = arith.mulf %23, %23 : vector<8x256xf32>
    %cst_11 = arith.constant dense<0.000000e+00> : vector<256xf32>
    %27 = vector.multi_reduction <add>, %26, %cst_11 [0] : vector<8x256xf32> to vector<256xf32>
    %28 = vector.shape_cast %27 : vector<256xf32> to vector<1x256xf32>
    %cst_12 = arith.constant 1.250000e-01 : f32
    %29 = vector.broadcast %cst_12 : f32 to vector<1x256xf32>
    %30 = arith.mulf %25, %29 : vector<1x256xf32>
    %cst_13 = arith.constant 1.250000e-01 : f32
    %31 = vector.broadcast %cst_13 : f32 to vector<1x256xf32>
    %32 = arith.mulf %28, %31 : vector<1x256xf32>
    %33 = arith.mulf %30, %30 : vector<1x256xf32>
    %34 = arith.subf %32, %33 : vector<1x256xf32>
    %cst_14 = arith.constant 0.000000e+00 : f32
    %35 = vector.broadcast %cst_14 : f32 to vector<1x256xf32>
    %36 = arith.maximumf %34, %35 : vector<1x256xf32>
    %37 = vector.broadcast %30 : vector<1x256xf32> to vector<8x256xf32>
    %38 = arith.subf %23, %37 : vector<8x256xf32>
    %cst_15 = arith.constant 9.99999974E-6 : f32
    %39 = vector.broadcast %cst_15 : f32 to vector<1x256xf32>
    %40 = arith.addf %36, %39 : vector<1x256xf32>
    %41 = math.rsqrt %40 : vector<1x256xf32>
    %42 = vector.broadcast %41 : vector<1x256xf32> to vector<8x256xf32>
    %43 = arith.mulf %38, %42 : vector<8x256xf32>
    %cst_16 = arith.constant 0.00999999977 : f32
    %44 = vector.broadcast %cst_16 : f32 to vector<8x256xf32>
    %45 = arith.mulf %44, %43 : vector<8x256xf32>
    %46 = arith.maximumf %43, %45 : vector<8x256xf32>
    %c0_i32_17 = arith.constant 0 : i32
    %47 = tpu.memref_slice %arg11[%c0_i32_17] : memref<2x!tpu.dma_semaphore, #tpu.memory_space<semaphore_mem>> -> memref<1x!tpu.dma_semaphore, #tpu.memory_space<semaphore_mem>>
    %48 = tpu.memref_squeeze %47 : memref<1x!tpu.dma_semaphore, #tpu.memory_space<semaphore_mem>> -> memref<!tpu.dma_semaphore, #tpu.memory_space<semaphore_mem>>
    tpu.wait_dma2 semaphore(%48 : memref<!tpu.dma_semaphore, #tpu.memory_space<semaphore_mem>>) src(%arg3 : memref<256x256xf32, #tpu.memory_space<any>>) dst(%arg9 : memref<256x256xf32, #tpu.memory_space<vmem>>)
    %c0_18 = arith.constant 0 : index
    %c0_19 = arith.constant 0 : index
    %49 = vector.load %arg9[%c0_18, %c0_19] : memref<256x256xf32, #tpu.memory_space<vmem>>, vector<256x256xf32>
    %cst_20 = arith.constant dense<0.000000e+00> : vector<8x256xf32>
    %50 = tpu.matmul %46, %49, %cst_20 {dimension_numbers = #tpu.dot_dimension_numbers<[1], [0], [0], [1], [0, 0, 1, 1], [], []>} : vector<8x256xf32>, vector<256x256xf32>, vector<8x256xf32> -> vector<8x256xf32>
    %c0_21 = arith.constant 0 : index
    %c0_22 = arith.constant 0 : index
    %51 = vector.load %arg4[%c0_21, %c0_22] : memref<4x256xf32, #tpu.memory_space<vmem>>, vector<4x256xf32>
    %52 = vector.extract_strided_slice %5 {offsets = [0, 0], sizes = [8, 1], strides = [1, 1]} : vector<8x4xf32> to vector<8x1xf32>
    %53 = vector.extract_strided_slice %51 {offsets = [0, 0], sizes = [1, 256], strides = [1, 1]} : vector<4x256xf32> to vector<1x256xf32>
    %54 = vector.broadcast %52 : vector<8x1xf32> to vector<8x256xf32>
    %55 = vector.broadcast %53 : vector<1x256xf32> to vector<8x256xf32>
    %56 = arith.mulf %54, %55 : vector<8x256xf32>
    %57 = arith.addf %50, %56 : vector<8x256xf32>
    %58 = vector.extract_strided_slice %5 {offsets = [0, 1], sizes = [8, 1], strides = [1, 1]} : vector<8x4xf32> to vector<8x1xf32>
    %59 = vector.extract_strided_slice %51 {offsets = [1, 0], sizes = [1, 256], strides = [1, 1]} : vector<4x256xf32> to vector<1x256xf32>
    %60 = vector.broadcast %58 : vector<8x1xf32> to vector<8x256xf32>
    %61 = vector.broadcast %59 : vector<1x256xf32> to vector<8x256xf32>
    %62 = arith.mulf %60, %61 : vector<8x256xf32>
    %63 = arith.addf %57, %62 : vector<8x256xf32>
    %64 = vector.extract_strided_slice %5 {offsets = [0, 2], sizes = [8, 1], strides = [1, 1]} : vector<8x4xf32> to vector<8x1xf32>
    %65 = vector.extract_strided_slice %51 {offsets = [2, 0], sizes = [1, 256], strides = [1, 1]} : vector<4x256xf32> to vector<1x256xf32>
    %66 = vector.broadcast %64 : vector<8x1xf32> to vector<8x256xf32>
    %67 = vector.broadcast %65 : vector<1x256xf32> to vector<8x256xf32>
    %68 = arith.mulf %66, %67 : vector<8x256xf32>
    %69 = arith.addf %63, %68 : vector<8x256xf32>
    %70 = vector.extract_strided_slice %5 {offsets = [0, 3], sizes = [8, 1], strides = [1, 1]} : vector<8x4xf32> to vector<8x1xf32>
    %71 = vector.extract_strided_slice %51 {offsets = [3, 0], sizes = [1, 256], strides = [1, 1]} : vector<4x256xf32> to vector<1x256xf32>
    %72 = vector.broadcast %70 : vector<8x1xf32> to vector<8x256xf32>
    %73 = vector.broadcast %71 : vector<1x256xf32> to vector<8x256xf32>
    %74 = arith.mulf %72, %73 : vector<8x256xf32>
    %75 = arith.addf %69, %74 : vector<8x256xf32>
    %cst_23 = arith.constant dense<0.000000e+00> : vector<256xf32>
    %76 = vector.multi_reduction <add>, %75, %cst_23 [0] : vector<8x256xf32> to vector<256xf32>
    %77 = vector.shape_cast %76 : vector<256xf32> to vector<1x256xf32>
    %78 = arith.mulf %75, %75 : vector<8x256xf32>
    %cst_24 = arith.constant dense<0.000000e+00> : vector<256xf32>
    %79 = vector.multi_reduction <add>, %78, %cst_24 [0] : vector<8x256xf32> to vector<256xf32>
    %80 = vector.shape_cast %79 : vector<256xf32> to vector<1x256xf32>
    %cst_25 = arith.constant 1.250000e-01 : f32
    %81 = vector.broadcast %cst_25 : f32 to vector<1x256xf32>
    %82 = arith.mulf %77, %81 : vector<1x256xf32>
    %cst_26 = arith.constant 1.250000e-01 : f32
    %83 = vector.broadcast %cst_26 : f32 to vector<1x256xf32>
    %84 = arith.mulf %80, %83 : vector<1x256xf32>
    %85 = arith.mulf %82, %82 : vector<1x256xf32>
    %86 = arith.subf %84, %85 : vector<1x256xf32>
    %cst_27 = arith.constant 0.000000e+00 : f32
    %87 = vector.broadcast %cst_27 : f32 to vector<1x256xf32>
    %88 = arith.maximumf %86, %87 : vector<1x256xf32>
    %89 = vector.broadcast %82 : vector<1x256xf32> to vector<8x256xf32>
    %90 = arith.subf %75, %89 : vector<8x256xf32>
    %cst_28 = arith.constant 9.99999974E-6 : f32
    %91 = vector.broadcast %cst_28 : f32 to vector<1x256xf32>
    %92 = arith.addf %88, %91 : vector<1x256xf32>
    %93 = math.rsqrt %92 : vector<1x256xf32>
    %94 = vector.broadcast %93 : vector<1x256xf32> to vector<8x256xf32>
    %95 = arith.mulf %90, %94 : vector<8x256xf32>
    %cst_29 = arith.constant 0.00999999977 : f32
    %96 = vector.broadcast %cst_29 : f32 to vector<8x256xf32>
    %97 = arith.mulf %96, %95 : vector<8x256xf32>
    %98 = arith.maximumf %95, %97 : vector<8x256xf32>
    %c1_i32_30 = arith.constant 1 : i32
    %99 = tpu.memref_slice %arg11[%c1_i32_30] : memref<2x!tpu.dma_semaphore, #tpu.memory_space<semaphore_mem>> -> memref<1x!tpu.dma_semaphore, #tpu.memory_space<semaphore_mem>>
    %100 = tpu.memref_squeeze %99 : memref<1x!tpu.dma_semaphore, #tpu.memory_space<semaphore_mem>> -> memref<!tpu.dma_semaphore, #tpu.memory_space<semaphore_mem>>
    tpu.wait_dma2 semaphore(%100 : memref<!tpu.dma_semaphore, #tpu.memory_space<semaphore_mem>>) src(%arg5 : memref<256x128xf32, #tpu.memory_space<any>>) dst(%arg10 : memref<256x128xf32, #tpu.memory_space<vmem>>)
    %c0_31 = arith.constant 0 : index
    %c0_32 = arith.constant 0 : index
    %101 = vector.load %arg10[%c0_31, %c0_32] : memref<256x128xf32, #tpu.memory_space<vmem>>, vector<256x128xf32>
    %cst_33 = arith.constant dense<0.000000e+00> : vector<8x128xf32>
    %102 = tpu.matmul %98, %101, %cst_33 {dimension_numbers = #tpu.dot_dimension_numbers<[1], [0], [0], [1], [0, 0, 1, 1], [], []>} : vector<8x256xf32>, vector<256x128xf32>, vector<8x128xf32> -> vector<8x128xf32>
    %cst_34 = arith.constant dense<0.000000e+00> : vector<128xf32>
    %103 = vector.multi_reduction <add>, %102, %cst_34 [0] : vector<8x128xf32> to vector<128xf32>
    %104 = vector.shape_cast %103 : vector<128xf32> to vector<1x128xf32>
    %105 = arith.mulf %102, %102 : vector<8x128xf32>
    %cst_35 = arith.constant dense<0.000000e+00> : vector<128xf32>
    %106 = vector.multi_reduction <add>, %105, %cst_35 [0] : vector<8x128xf32> to vector<128xf32>
    %107 = vector.shape_cast %106 : vector<128xf32> to vector<1x128xf32>
    %cst_36 = arith.constant 1.250000e-01 : f32
    %108 = vector.broadcast %cst_36 : f32 to vector<1x128xf32>
    %109 = arith.mulf %104, %108 : vector<1x128xf32>
    %cst_37 = arith.constant 1.250000e-01 : f32
    %110 = vector.broadcast %cst_37 : f32 to vector<1x128xf32>
    %111 = arith.mulf %107, %110 : vector<1x128xf32>
    %112 = arith.mulf %109, %109 : vector<1x128xf32>
    %113 = arith.subf %111, %112 : vector<1x128xf32>
    %cst_38 = arith.constant 0.000000e+00 : f32
    %114 = vector.broadcast %cst_38 : f32 to vector<1x128xf32>
    %115 = arith.maximumf %113, %114 : vector<1x128xf32>
    %116 = vector.broadcast %109 : vector<1x128xf32> to vector<8x128xf32>
    %117 = arith.subf %102, %116 : vector<8x128xf32>
    %cst_39 = arith.constant 9.99999974E-6 : f32
    %118 = vector.broadcast %cst_39 : f32 to vector<1x128xf32>
    %119 = arith.addf %115, %118 : vector<1x128xf32>
    %120 = math.rsqrt %119 : vector<1x128xf32>
    %121 = vector.broadcast %120 : vector<1x128xf32> to vector<8x128xf32>
    %122 = arith.mulf %117, %121 : vector<8x128xf32>
    %cst_40 = arith.constant 0.00999999977 : f32
    %123 = vector.broadcast %cst_40 : f32 to vector<8x128xf32>
    %124 = arith.mulf %123, %122 : vector<8x128xf32>
    %125 = arith.maximumf %122, %124 : vector<8x128xf32>
    %c0_41 = arith.constant 0 : index
    %126 = memref.load %arg7[%c0_41] : memref<1xf32, #tpu.memory_space<smem>>
    %c0_42 = arith.constant 0 : index
    %c0_43 = arith.constant 0 : index
    %127 = vector.load %arg6[%c0_42, %c0_43] : memref<1x128xf32, #tpu.memory_space<vmem>>, vector<1x128xf32>
    %128 = vector.broadcast %127 : vector<1x128xf32> to vector<8x128xf32>
    %129 = arith.mulf %125, %128 : vector<8x128xf32>
    %cst_44 = arith.constant dense<0.000000e+00> : vector<8xf32>
    %130 = vector.multi_reduction <add>, %129, %cst_44 [1] : vector<8x128xf32> to vector<8xf32>
    %131 = vector.shape_cast %130 : vector<8xf32> to vector<8x1xf32>
    %132 = vector.broadcast %126 : f32 to vector<8x1xf32>
    %133 = arith.addf %131, %132 : vector<8x1xf32>
    %c0_45 = arith.constant 0 : index
    %c0_46 = arith.constant 0 : index
    %134 = vector.load %arg8[%c0_45, %c0_46] : memref<8x1xf32, #tpu.memory_space<vmem>>, vector<8x1xf32>
    tpu.vector_store %arg8[%c0_45, %c0_46], %133 {strides = array<i32>} : memref<8x1xf32, #tpu.memory_space<vmem>>, vector<8x1xf32>,
    return
  }
}

</mosaic_0001>

<llo_original>
// kernel: tpu_custom_call.1
$region0: #{tpu_custom_call.1}
  #allocation0 [shape = 'u32[]', space=smem, size = 0x4, offset = 0x4, fixed_abs, tag = 'smem constant byte address 0x4 - core index']
  #allocation1 [shape = 'u32[144,128]{1,0:T(1,128)}', space=vmem, size = 0x12000, scoped, tag = 'internal scratch']
  #allocation2 [shape = 'f32[256,256]{1,0:T(8,128)}', space=vmem, size = 0x40000, scoped, tag = 'scratch operand']
  #allocation3 [shape = 'f32[256,128]{1,0:T(8,128)}', space=vmem, size = 0x20000, scoped, tag = 'scratch operand']
  #allocation4 [shape = 's32[2]{0}', space=sflag, size = 0x8, scoped, tag = 'scratch operand']
  #allocation5 [shape = 'f32[1]{0:T(128)S(6)}', space=smem, size = 0x200, scoped, tag = 'scoped memory for tpu_custom_call.1']
  #allocation8 [shape = 's32[]', space=sflag, size = 0x4, offset = 0, fixed_abs, tag = 'sflag constant byte address 0x0 - dummy sync flag']
  #allocation9 [shape = 's32[]', space=sflag, size = 0x4, offset = 0, fixed_abs, tag = 'sflag constant byte address 0x0 - dummy sync flag']
  #allocation10 [shape = 'u32[]', space=smem, size = 0x4, offset = 0x44, fixed_abs, tag = 'smem constant byte address 0x44 - assertion arg 0']
  #allocation11 [shape = 'u32[]', space=smem, size = 0x4, offset = 0x48, fixed_abs, tag = 'smem constant byte address 0x48 - assertion arg 1']
  #allocation12 [shape = 's32[]', space=sflag, size = 0x4, offset = 0, fixed_abs, tag = 'sflag constant byte address 0x0 - dummy sync flag']
  #allocation13 [shape = 's32[]', space=sflag, size = 0x4, offset = 0, fixed_abs, tag = 'sflag constant byte address 0x0 - dummy sync flag']
  %s0 = inlined_call_operand.vmem [shape: f32[8,33], index: 0, kind: input, shape index: {}]
  %s1 = inlined_call_operand.vmem [shape: f32[8,4], index: 1, kind: input, shape index: {}]
  %s2 = inlined_call_operand.hbm [shape: f32[33,256], index: 2, kind: input, shape index: {}]
  %s3 = inlined_call_operand.hbm [shape: f32[256,256], index: 3, kind: input, shape index: {}]
  %s4 = inlined_call_operand.vmem [shape: f32[4,256], index: 4, kind: input, shape index: {}]
  %s5 = inlined_call_operand.hbm [shape: f32[256,128], index: 5, kind: input, shape index: {}]
  %s6 = inlined_call_operand.vmem [shape: f32[1,128], index: 6, kind: input, shape index: {}]
  %s7 = inlined_call_operand.<no memory space> [shape: f32[1], index: 7, kind: input, shape index: {}]
  %s8 = inlined_call_operand.vmem [shape: f32[8,1], index: 8, kind: output, shape index: {}]
  %s9 = sld [smem:[#allocation0]]
  $region46: #{tpu_custom_call.1} parent=0
    _
  %s11 = ssub.s32 1, %s9
  %s12 = scalar_select 0, %s11, %s9
  %13 = sst [smem:[#allocation5]] %s7
  $region1: #{tpu_custom_call.1} parent=0
    #allocation6 [shape = 'u8[40960]{0}', space=vmem, size = 0xa000, scoped, tag = 'input window, operand 2, single buffered']
    #allocation7 [shape = 's32[1]{0}', space=sflag, size = 0x4, scoped, tag = 'scoped memory for tpu_custom_call.1']
    %14 = vsyncpa [#allocation7], 0
    // Predicated region
    $region2: #{tpu_custom_call.1} parent=1 // pred_check
      _
    $region3: #{tpu_custom_call.1} parent=1 // pred_check_branch
      %16 = sbr.rel (0) target = $region5
    $region4: #{tpu_custom_call.1} parent=1 // pred_region
      _
    $region5: #{tpu_custom_call.1} parent=1 // pred_fallthru
      _
    // Predicated region
    $region6: #{tpu_custom_call.1} parent=1 // pred_check
      _
    $region7: #{tpu_custom_call.1} parent=1 // pred_check_branch
      %18 = sbr.rel (0) target = $region9
    $region8: #{tpu_custom_call.1} parent=1 // pred_region
      _
    $region9: #{tpu_custom_call.1} parent=1 // pred_fallthru
      _
    // Predicated region
    $region10: #{tpu_custom_call.1} parent=1 // pred_check
      _
    $region11: #{tpu_custom_call.1} parent=1 // pred_check_branch
      %20 = sbr.rel (0) target = $region13
    $region12: #{tpu_custom_call.1} parent=1 // pred_region
      %s22 = ssub.s32 1280, 1280
      %23 = vsyncadd [#allocation7], %s22
      %s24 = sshll.u32 [#allocation6], 4
      %s25 = int_to_ptr.vmem [resolvable:$true] %s24
      %30 = dma.hbm_to_vmem [thread:$0]  %s2, 1280, %s25, [#allocation7], 256, 256, 16
    $region13: #{tpu_custom_call.1} parent=1 // pred_fallthru
      _
    // Predicated region
    $region14: #{tpu_custom_call.1} parent=1 // pred_check
      _
    $region15: #{tpu_custom_call.1} parent=1 // pred_check_branch
      %32 = sbr.rel (0) target = $region17
    $region16: #{tpu_custom_call.1} parent=1 // pred_region
      _
    $region17: #{tpu_custom_call.1} parent=1 // pred_fallthru
      _
    // Predicated region
    $region18: #{tpu_custom_call.1} parent=1 // pred_check
      _
    $region19: #{tpu_custom_call.1} parent=1 // pred_check_branch
      %34 = sbr.rel (0) target = $region21
    $region20: #{tpu_custom_call.1} parent=1 // pred_region
      _
    $region21: #{tpu_custom_call.1} parent=1 // pred_fallthru
      _
    // Predicated region
    $region22: #{tpu_custom_call.1} parent=1 // pred_check
      _
    $region23: #{tpu_custom_call.1} parent=1 // pred_check_branch
      %36 = sbr.rel (0) target = $region25
    $region24: #{tpu_custom_call.1} parent=1 // pred_region
      _
    $region25: #{tpu_custom_call.1} parent=1 // pred_fallthru
      _
    // Predicated region
    $region26: #{tpu_custom_call.1} parent=1 // pred_check
      _
    $region27: #{tpu_custom_call.1} parent=1 // pred_check_branch
      %38 = sbr.rel (0) target = $region29
    $region28: #{tpu_custom_call.1} parent=1 // pred_region
      %39 = dma.done [#allocation7], 1280
    $region29: #{tpu_custom_call.1} parent=1 // pred_fallthru
      _
    // Predicated region
    $region30: #{tpu_custom_call.1} parent=1 // pred_check
      _
    $region31: #{tpu_custom_call.1} parent=1 // pred_check_branch
      %41 = sbr.rel target = $region33
    $region32: #{tpu_custom_call.1} parent=1 // pred_region
      %42 = sst [smem:[#allocation10]] [#allocation9]
      %43 = sst [smem:[#allocation11]] [#allocation8]
    $region33: #{tpu_custom_call.1} parent=1 // pred_fallthru
      _
    %45 = shalt.err (0)
    %s47 = sshll.u32 [#allocation2], 4
    %s48 = int_to_ptr.vmem [resolvable:$true] %s47
    %50 = dma.hbm_to_vmem [thread:$0]  %s3, 8192, %s48, [#allocation4]
    %s51 = scalar_lea.sflag [#allocation4], 1
    // Predicated region
    $region34: #{tpu_custom_call.1} parent=1 // pred_check
      _
    $region35: #{tpu_custom_call.1} parent=1 // pred_check_branch
      %53 = sbr.rel target = $region37
    $region36: #{tpu_custom_call.1} parent=1 // pred_region
      %54 = sst [smem:[#allocation10]] [#allocation13]
      %55 = sst [smem:[#allocation11]] [#allocation12]
    $region37: #{tpu_custom_call.1} parent=1 // pred_fallthru
      _
    %57 = shalt.err (0)
    %s59 = sshll.u32 [#allocation3], 4
    %s60 = int_to_ptr.vmem [resolvable:$true] %s59
    %62 = dma.hbm_to_vmem [thread:$0]  %s5, 4096, %s60, %s51
    %v63 = vld [vmem:[%s0] sm:$0xff]
    %v64 = vld [vmem:[%s1] sm:$0xff]
    %vm65 = vcmask 269312
    %v66 = vsel %vm65, %v63, 0.0
    %v67 = vrot.slane %v66, 4
    %v68 = vadd.f32 %v66, %v67
    %v69 = vrot.slane %v68, 2
    %v70 = vadd.f32 %v68, %v69
    %v71 = vrot.slane %v70, 1
    %v72 = vadd.f32 %v70, %v71
    %v73 = vmul.f32 %v72, 0.125
    %v74 = vsub.f32 %v63, %v73
    %v75 = vmul.f32 %v74, %v74
    %v76 = vsel %vm65, %v75, 0.0
    %v77 = vrot.slane %v76, 4
    %v78 = vadd.f32 %v76, %v77
    %v79 = vrot.slane %v78, 2
    %v80 = vadd.f32 %v78, %v79
    %v81 = vrot.slane %v80, 1
    %v82 = vadd.f32 %v80, %v81
    %v83 = vmul.f32 %v82, 0.125
    %v84 = vadd.f32 %v83, 1e-05
    %v85 = vrsqrt.pop %v84
    %v86 = vmul.f32 %v74, %v85
    %v87 = vld [vmem:[#allocation6] sm:$0xff]
    %v88 = vld [vmem:[#allocation6 + $0x8] sm:$0xff]
    %v89 = vld [vmem:[#allocation6 + $0x10] sm:$0xff]
    %v90 = vld [vmem:[#allocation6 + $0x18] sm:$0xff]
    %v91 = vld [vmem:[#allocation6 + $0x20] sm:$0xff]
    %v92 = vld [vmem:[#allocation6 + $0x28] sm:$0xff]
    %v93 = vld [vmem:[#allocation6 + $0x30] sm:$0xff]
    %v94 = vld [vmem:[#allocation6 + $0x38] sm:$0xff]
    %v95 = vld [vmem:[#allocation6 + $0x40] sm:$0x1]
    %v96 = vld [vmem:[#allocation6 + $0x48] sm:$0x1]
    %v98 = vsel %vm65, %v86, 0
    %vm100 = vcmask 1040384
    %v102 = vsel %vm100, %v95, 0
    %v105 = vsel %vm100, %v96, 0
    %107 = vmatprep.subr.mxu0 %v88
    %108 = vmatpush1.msra.mxu0 %v87
    %109 = vmatprep.subr.mxu0 %v90
    %110 = vmatpush1.msra.mxu0 %v89
    %111 = vmatprep.subr.mxu0 %v92
    %112 = vmatpush1.msra.mxu0 %v91
    %113 = vmatprep.subr.mxu0 %v94
    %114 = vmatpush1.msra.mxu0 %v93
    %115 = vmatprep.subr.mxu0 %v105
    %116 = vmatpush1.msra.mxu0 %v102
    %117 = vmatprep.subr.mxu0 0.0
    %118 = vmatpush1.msra.mxu0 0.0
    %119 = vmatprep.subr.mxu0 0.0
    %120 = vmatpush1.msra.mxu0 0.0
    %121 = vmatprep.subr.mxu0 0.0
    %122 = vmatpush1.msra.mxu0 0.0
    %123 = vmatprep.subr.mxu0 0.0
    %124 = vmatpush1.msra.mxu0 0.0
    %125 = vmatprep.subr.mxu0 0.0
    %126 = vmatpush1.msra.mxu0 0.0
    %127 = vmatprep.subr.mxu0 0.0
    %128 = vmatpush1.msra.mxu0 0.0
    %129 = vmatprep.subr.mxu0 0.0
    %130 = vmatpush1.msra.mxu0 0.0
    %131 = vmatprep.subr.mxu0 0.0
    %132 = vmatpush1.msra.mxu0 0.0
    %133 = vmatprep.subr.mxu0 0.0
    %134 = vmatpush1.msra.mxu0 0.0
    %135 = vmatprep.subr.mxu0 0.0
    %136 = vmatpush1.msra.mxu0 0.0
    %137 = vmatprep.subr.mxu0 0.0
    %138 = vmatpush1.msra.mxu0 0.0
    %139 = vmatprep.subr.mxu0 0.0
    %140 = vmatpush1.msra.mxu0 0.0
    %141 = vmatprep.subr.mxu0 0.0
    %142 = vmatpush1.msra.mxu0 0.0
    %143 = vmatprep.subr.mxu0 0.0
    %144 = vmatpush1.msra.mxu0 0.0
    %145 = vmatprep.subr.mxu0 0.0
    %146 = vmatpush1.msra.mxu0 0.0
    %147 = vmatprep.subr.mxu0 0.0
    %148 = vmatpush1.msra.mxu0 0.0
    %149 = vmatprep.subr.mxu0 0.0
    %150 = vmatpush1.msra.mxu0 0.0
    %151 = vmatprep.subr.mxu0 0.0
    %152 = vmatpush1.msra.mxu0 0.0
    %153 = vmatprep.subr.mxu0 0.0
    %154 = vmatpush1.msra.mxu0 0.0
    %155 = vmatprep.subr.mxu0 0.0
    %156 = vmatpush1.msra.mxu0 0.0
    %157 = vmatprep.subr.mxu0 0.0
    %158 = vmatpush1.msra.mxu0 0.0
    %159 = vmatprep.subr.mxu0 0.0
    %160 = vmatpush1.msra.mxu0 0.0
    %161 = vmatprep.subr.mxu0 0.0
    %162 = vmatpush1.msra.mxu0 0.0
    %163 = vmatprep.subr.mxu0 0.0
    %164 = vmatpush1.msra.mxu0 0.0
    %165 = vmatprep.subr.mxu0 0.0
    %166 = vmatpush1.msra.mxu0 0.0
    %167 = vmatprep.subr.mxu0 0.0
    %168 = vmatpush1.msra.mxu0 0.0
    %169 = vmatprep.subr.mxu0 0.0
    %170 = vmatpush1.msra.mxu0 0.0
    %171 = vmatprep.mubr.f32.mxu0 0.0
    %172 = vmatmul.mubr.f32.gmra.mrb[0].mxu0 %v98
    %v173 = vpop.f32.mrb[0].mxu0
    %v174 = vadd.f32 0.0, %v173
    %v175 = vpop.f32.mrb[0].mxu0
    %v176 = vadd.f32 0.0, %v175
    %177 = vdwg.mxu0
    %v178 = vrot.slane %v174, 4
    %v179 = vadd.f32 %v174, %v178
    %v180 = vrot.slane %v179, 2
    %v181 = vadd.f32 %v179, %v180
    %v182 = vrot.slane %v181, 1
    %v183 = vadd.f32 %v181, %v182
    %v184 = vrot.slane %v176, 4
    %v185 = vadd.f32 %v176, %v184
    %v186 = vrot.slane %v185, 2
    %v187 = vadd.f32 %v185, %v186
    %v188 = vrot.slane %v187, 1
    %v189 = vadd.f32 %v187, %v188
    %v190 = vmul.f32 %v174, %v174
    %v191 = vmul.f32 %v176, %v176
    %v192 = vrot.slane %v190, 4
    %v193 = vadd.f32 %v190, %v192
    %v194 = vrot.slane %v193, 2
    %v195 = vadd.f32 %v193, %v194
    %v196 = vrot.slane %v195, 1
    %v197 = vadd.f32 %v195, %v196
    %v198 = vrot.slane %v191, 4
    %v199 = vadd.f32 %v191, %v198
    %v200 = vrot.slane %v199, 2
    %v201 = vadd.f32 %v199, %v200
    %v202 = vrot.slane %v201, 1
    %v203 = vadd.f32 %v201, %v202
    %v204 = vmul.f32 %v183, 0.125
    %v205 = vmul.f32 %v189, 0.125
    %v206 = vmul.f32 %v197, 0.125
    %v207 = vmul.f32 %v203, 0.125
    %v208 = vmul.f32 %v204, %v204
    %v209 = vmul.f32 %v205, %v205
    %v210 = vsub.f32 %v206, %v208
    %v211 = vsub.f32 %v207, %v209
    %v212 = vmax.f32 %v210, 0.0
    %v213 = vmax.f32 %v211, 0.0
    %v214 = vsub.f32 %v174, %v204
    %v215 = vsub.f32 %v176, %v205
    %v216 = vadd.f32 %v212, 1e-05
    %v217 = vadd.f32 %v213, 1e-05
    %v218 = vrsqrt.pop %v216
    %v219 = vrsqrt.pop %v217
    %v220 = vmul.f32 %v214, %v218
    %v221 = vmul.f32 %v215, %v219
    %v222 = vmul.f32 %v220, 0.01
    %v223 = vmul.f32 %v221, 0.01
    %v224 = vmax.f32 %v220, %v222
    %v225 = vmax.f32 %v221, %v223
    %s226 = smul.u32 8, 32
    %s227 = smul.u32 %s226, 2
    %s228 = sshll.u32 %s227, 4
    %229 = dma.done [#allocation4], %s228
    %v230 = vld [vmem:[#allocation2] sm:$0xff]
    %v231 = vld [vmem:[#allocation2 + $0x8] sm:$0xff]
    %v232 = vld [vmem:[#allocation2 + $0x10] sm:$0xff]
    %v233 = vld [vmem:[#allocation2 + $0x18] sm:$0xff]
    %v234 = vld [vmem:[#allocation2 + $0x20] sm:$0xff]
    %v235 = vld [vmem:[#allocation2 + $0x28] sm:$0xff]
    %v236 = vld [vmem:[#allocation2 + $0x30] sm:$0xff]
    %v237 = vld [vmem:[#allocation2 + $0x38] sm:$0xff]
    %v238 = vld [vmem:[#allocation2 + $0x40] sm:$0xff]
    %v239 = vld [vmem:[#allocation2 + $0x48] sm:$0xff]
    %v240 = vld [vmem:[#allocation2 + $0x50] sm:$0xff]
    %v241 = vld [vmem:[#allocation2 + $0x58] sm:$0xff]
    %v242 = vld [vmem:[#allocation2 + $0x60] sm:$0xff]
    %v243 = vld [vmem:[#allocation2 + $0x68] sm:$0xff]
    %v244 = vld [vmem:[#allocation2 + $0x70] sm:$0xff]
    %v245 = vld [vmem:[#allocation2 + $0x78] sm:$0xff]
    %v246 = vld [vmem:[#allocation2 + $0x80] sm:$0xff]
    %v247 = vld [vmem:[#allocation2 + $0x88] sm:$0xff]
    %v248 = vld [vmem:[#allocation2 + $0x90] sm:$0xff]
    %v249 = vld [vmem:[#allocation2 + $0x98] sm:$0xff]
    %v250 = vld [vmem:[#allocation2 + $0xa0] sm:$0xff]
    %v251 = vld [vmem:[#allocation2 + $0xa8] sm:$0xff]
    %v252 = vld [vmem:[#allocation2 + $0xb0] sm:$0xff]
    %v253 = vld [vmem:[#allocation2 + $0xb8] sm:$0xff]
    %v254 = vld [vmem:[#allocation2 + $0xc0] sm:$0xff]
    %v255 = vld [vmem:[#allocation2 + $0xc8] sm:$0xff]
    %v256 = vld [vmem:[#allocation2 + $0xd0] sm:$0xff]
    %v257 = vld [vmem:[#allocation2 + $0xd8] sm:$0xff]
    %v258 = vld [vmem:[#allocation2 + $0xe0] sm:$0xff]
    %v259 = vld [vmem:[#allocation2 + $0xe8] sm:$0xff]
    %v260 = vld [vmem:[#allocation2 + $0xf0] sm:$0xff]
    %v261 = vld [vmem:[#allocation2 + $0xf8] sm:$0xff]
    %v262 = vld [vmem:[#allocation2 + $0x100] sm:$0xff]
    %v263 = vld [vmem:[#allocation2 + $0x108] sm:$0xff]
    %v264 = vld [vmem:[#allocation2 + $0x110] sm:$0xff]
    %v265 = vld [vmem:[#allocation2 + $0x118] sm:$0xff]
    %v266 = vld [vmem:[#allocation2 + $0x120] sm:$0xff]
    %v267 = vld [vmem:[#allocation2 + $0x128] sm:$0xff]
    %v268 = vld [vmem:[#allocation2 + $0x130] sm:$0xff]
    %v269 = vld [vmem:[#allocation2 + $0x138] sm:$0xff]
    %v270 = vld [vmem:[#allocation2 + $0x140] sm:$0xff]
    %v271 = vld [vmem:[#allocation2 + $0x148] sm:$0xff]
    %v272 = vld [vmem:[#allocation2 + $0x150] sm:$0xff]
    %v273 = vld [vmem:[#allocation2 + $0x158] sm:$0xff]
    %v274 = vld [vmem:[#allocation2 + $0x160] sm:$0xff]
    %v275 = vld [vmem:[#allocation2 + $0x168] sm:$0xff]
    %v276 = vld [vmem:[#allocation2 + $0x170] sm:$0xff]
    %v277 = vld [vmem:[#allocation2 + $0x178] sm:$0xff]
    %v278 = vld [vmem:[#allocation2 + $0x180] sm:$0xff]
    %v279 = vld [vmem:[#allocation2 + $0x188] sm:$0xff]
    %v280 = vld [vmem:[#allocation2 + $0x190] sm:$0xff]
    %v281 = vld [vmem:[#allocation2 + $0x198] sm:$0xff]
    %v282 = vld [vmem:[#allocation2 + $0x1a0] sm:$0xff]
    %v283 = vld [vmem:[#allocation2 + $0x1a8] sm:$0xff]
    %v284 = vld [vmem:[#allocation2 + $0x1b0] sm:$0xff]
    %v285 = vld [vmem:[#allocation2 + $0x1b8] sm:$0xff]
    %v286 = vld [vmem:[#allocation2 + $0x1c0] sm:$0xff]
    %v287 = vld [vmem:[#allocation2 + $0x1c8] sm:$0xff]
    %v288 = vld [vmem:[#allocation2 + $0x1d0] sm:$0xff]
    %v289 = vld [vmem:[#allocation2 + $0x1d8] sm:$0xff]
    %v290 = vld [vmem:[#allocation2 + $0x1e0] sm:$0xff]
    %v291 = vld [vmem:[#allocation2 + $0x1e8] sm:$0xff]
    %v292 = vld [vmem:[#allocation2 + $0x1f0] sm:$0xff]
    %v293 = vld [vmem:[#allocation2 + $0x1f8] sm:$0xff]
    %v294 = vld [vmem:[%s4] sm:$0xff]
    %296 = vset.pattern.permute.xlu0 0
    %297 = vperm.xlu0 %296, %v64
    %v298 = vpop.permute.xlu0 %297
    %v301 = vlaneseq
    %v302 = vshrl.u32 %v301, 7
    %v303 = vsub.s32 0, %v302
    %v304 = vrot.slane %v294, %v303
    %v305 = vlaneseq
    %v306 = vshrl.u32 %v305, 7
    %v307 = vsub.s32 4, %v306
    %v308 = vrot.slane %v294, %v307
    %v311 = vlaneseq
    %v312 = vshrl.u32 %v311, 7
    %v313 = vsub.s32 0, %v312
    %v314 = vrot.slane %v304, %v313
    %v315 = vlaneseq
    %v316 = vshrl.u32 %v315, 7
    %v317 = vsub.s32 0, %v316
    %v318 = vrot.slane %v308, %v317
    %v319 = vmul.f32 %v298, %v314
    %v320 = vmul.f32 %v298, %v318
    %321 = vmatprep.subr.mxu0 %v231
    %322 = vmatpush1.msra.mxu0 %v230
    %323 = vmatprep.subr.mxu0 %v233
    %324 = vmatpush1.msra.mxu0 %v232
    %325 = vmatprep.subr.mxu0 %v235
    %326 = vmatpush1.msra.mxu0 %v234
    %327 = vmatprep.subr.mxu0 %v237
    %328 = vmatpush1.msra.mxu0 %v236
    %329 = vmatprep.subr.mxu0 %v239
    %330 = vmatpush1.msra.mxu0 %v238
    %331 = vmatprep.subr.mxu0 %v241
    %332 = vmatpush1.msra.mxu0 %v240
    %333 = vmatprep.subr.mxu0 %v243
    %334 = vmatpush1.msra.mxu0 %v242
    %335 = vmatprep.subr.mxu0 %v245
    %336 = vmatpush1.msra.mxu0 %v244
    %337 = vmatprep.subr.mxu0 %v247
    %338 = vmatpush1.msra.mxu0 %v246
    %339 = vmatprep.subr.mxu0 %v249
    %340 = vmatpush1.msra.mxu0 %v248
    %341 = vmatprep.subr.mxu0 %v251
    %342 = vmatpush1.msra.mxu0 %v250
    %343 = vmatprep.subr.mxu0 %v253
    %344 = vmatpush1.msra.mxu0 %v252
    %345 = vmatprep.subr.mxu0 %v255
    %346 = vmatpush1.msra.mxu0 %v254
    %347 = vmatprep.subr.mxu0 %v257
    %348 = vmatpush1.msra.mxu0 %v256
    %349 = vmatprep.subr.mxu0 %v259
    %350 = vmatpush1.msra.mxu0 %v258
    %351 = vmatprep.subr.mxu0 %v261
    %352 = vmatpush1.msra.mxu0 %v260
    %353 = vmatprep.subr.mxu0 %v263
    %354 = vmatpush1.msra.mxu0 %v262
    %355 = vmatprep.subr.mxu0 %v265
    %356 = vmatpush1.msra.mxu0 %v264
    %357 = vmatprep.subr.mxu0 %v267
    %358 = vmatpush1.msra.mxu0 %v266
    %359 = vmatprep.subr.mxu0 %v269
    %360 = vmatpush1.msra.mxu0 %v268
    %361 = vmatprep.subr.mxu0 %v271
    %362 = vmatpush1.msra.mxu0 %v270
    %363 = vmatprep.subr.mxu0 %v273
    %364 = vmatpush1.msra.mxu0 %v272
    %365 = vmatprep.subr.mxu0 %v275
    %366 = vmatpush1.msra.mxu0 %v274
    %367 = vmatprep.subr.mxu0 %v277
    %368 = vmatpush1.msra.mxu0 %v276
    %369 = vmatprep.subr.mxu0 %v279
    %370 = vmatpush1.msra.mxu0 %v278
    %371 = vmatprep.subr.mxu0 %v281
    %372 = vmatpush1.msra.mxu0 %v280
    %373 = vmatprep.subr.mxu0 %v283
    %374 = vmatpush1.msra.mxu0 %v282
    %375 = vmatprep.subr.mxu0 %v285
    %376 = vmatpush1.msra.mxu0 %v284
    %377 = vmatprep.subr.mxu0 %v287
    %378 = vmatpush1.msra.mxu0 %v286
    %379 = vmatprep.subr.mxu0 %v289
    %380 = vmatpush1.msra.mxu0 %v288
    %381 = vmatprep.subr.mxu0 %v291
    %382 = vmatpush1.msra.mxu0 %v290
    %383 = vmatprep.subr.mxu0 %v293
    %384 = vmatpush1.msra.mxu0 %v292
    %385 = vmatprep.mubr.f32.mxu0 %v225
    %386 = vmatmul.mubr.f32.gmra.mrb[0].mxu0 %v224
    %v387 = vpop.f32.mrb[0].mxu0
    %v388 = vadd.f32 %v319, %v387
    %v389 = vpop.f32.mrb[0].mxu0
    %v390 = vadd.f32 %v320, %v389
    %391 = vdwg.mxu0
    %392 = vset.pattern.permute.xlu0 1
    %393 = vperm.xlu0 %392, %v64
    %v394 = vpop.permute.xlu0 %393
    %v396 = vlaneseq
    %v397 = vshrl.u32 %v396, 7
    %v398 = vsub.s32 1, %v397
    %v399 = vrot.slane %v294, %v398
    %v400 = vlaneseq
    %v401 = vshrl.u32 %v400, 7
    %v402 = vsub.s32 5, %v401
    %v403 = vrot.slane %v294, %v402
    %v406 = vlaneseq
    %v407 = vshrl.u32 %v406, 7
    %v408 = vsub.s32 1, %v407
    %v409 = vrot.slane %v399, %v408
    %v410 = vlaneseq
    %v411 = vshrl.u32 %v410, 7
    %v412 = vsub.s32 1, %v411
    %v413 = vrot.slane %v403, %v412
    %v414 = vmul.f32 %v394, %v409
    %v415 = vmul.f32 %v394, %v413
    %v416 = vadd.f32 %v388, %v414
    %v417 = vadd.f32 %v390, %v415
    %418 = vset.pattern.permute.xlu0 2
    %419 = vperm.xlu0 %418, %v64
    %v420 = vpop.permute.xlu0 %419
    %v422 = vlaneseq
    %v423 = vshrl.u32 %v422, 7
    %v424 = vsub.s32 2, %v423
    %v425 = vrot.slane %v294, %v424
    %v426 = vlaneseq
    %v427 = vshrl.u32 %v426, 7
    %v428 = vsub.s32 6, %v427
    %v429 = vrot.slane %v294, %v428
    %v432 = vlaneseq
    %v433 = vshrl.u32 %v432, 7
    %v434 = vsub.s32 2, %v433
    %v435 = vrot.slane %v425, %v434
    %v436 = vlaneseq
    %v437 = vshrl.u32 %v436, 7
    %v438 = vsub.s32 2, %v437
    %v439 = vrot.slane %v429, %v438
    %v440 = vmul.f32 %v420, %v435
    %v441 = vmul.f32 %v420, %v439
    %v442 = vadd.f32 %v416, %v440
    %v443 = vadd.f32 %v417, %v441
    %444 = vset.pattern.permute.xlu0 3
    %445 = vperm.xlu0 %444, %v64
    %v446 = vpop.permute.xlu0 %445
    %v448 = vlaneseq
    %v449 = vshrl.u32 %v448, 7
    %v450 = vsub.s32 3, %v449
    %v451 = vrot.slane %v294, %v450
    %v452 = vlaneseq
    %v453 = vshrl.u32 %v452, 7
    %v454 = vsub.s32 7, %v453
    %v455 = vrot.slane %v294, %v454
    %v458 = vlaneseq
    %v459 = vshrl.u32 %v458, 7
    %v460 = vsub.s32 3, %v459
    %v461 = vrot.slane %v451, %v460
    %v462 = vlaneseq
    %v463 = vshrl.u32 %v462, 7
    %v464 = vsub.s32 3, %v463
    %v465 = vrot.slane %v455, %v464
    %v466 = vmul.f32 %v446, %v461
    %v467 = vmul.f32 %v446, %v465
    %v468 = vadd.f32 %v442, %v466
    %v469 = vadd.f32 %v443, %v467
    %v470 = vrot.slane %v468, 4
    %v471 = vadd.f32 %v468, %v470
    %v472 = vrot.slane %v471, 2
    %v473 = vadd.f32 %v471, %v472
    %v474 = vrot.slane %v473, 1
    %v475 = vadd.f32 %v473, %v474
    %v476 = vrot.slane %v469, 4
    %v477 = vadd.f32 %v469, %v476
    %v478 = vrot.slane %v477, 2
    %v479 = vadd.f32 %v477, %v478
    %v480 = vrot.slane %v479, 1
    %v481 = vadd.f32 %v479, %v480
    %v482 = vmul.f32 %v468, %v468
    %v483 = vmul.f32 %v469, %v469
    %v484 = vrot.slane %v482, 4
    %v485 = vadd.f32 %v482, %v484
    %v486 = vrot.slane %v485, 2
    %v487 = vadd.f32 %v485, %v486
    %v488 = vrot.slane %v487, 1
    %v489 = vadd.f32 %v487, %v488
    %v490 = vrot.slane %v483, 4
    %v491 = vadd.f32 %v483, %v490
    %v492 = vrot.slane %v491, 2
    %v493 = vadd.f32 %v491, %v492
    %v494 = vrot.slane %v493, 1
    %v495 = vadd.f32 %v493, %v494
    %v496 = vmul.f32 %v475, 0.125
    %v497 = vmul.f32 %v481, 0.125
    %v498 = vmul.f32 %v489, 0.125
    %v499 = vmul.f32 %v495, 0.125
    %v500 = vmul.f32 %v496, %v496
    %v501 = vmul.f32 %v497, %v497
    %v502 = vsub.f32 %v498, %v500
    %v503 = vsub.f32 %v499, %v501
    %v504 = vmax.f32 %v502, 0.0
    %v505 = vmax.f32 %v503, 0.0
    %v506 = vsub.f32 %v468, %v496
    %v507 = vsub.f32 %v469, %v497
    %v508 = vadd.f32 %v504, 1e-05
    %v509 = vadd.f32 %v505, 1e-05
    %v510 = vrsqrt.pop %v508
    %v511 = vrsqrt.pop %v509
    %v512 = vmul.f32 %v506, %v510
    %v513 = vmul.f32 %v507, %v511
    %v514 = vmul.f32 %v512, 0.01
    %v515 = vmul.f32 %v513, 0.01
    %v516 = vmax.f32 %v512, %v514
    %v517 = vmax.f32 %v513, %v515
    %s518 = smul.u32 256, 1
    %s519 = sshll.u32 %s518, 4
    %520 = dma.done %s51, %s519
    %v521 = vld [vmem:[#allocation3] sm:$0xff]
    %v522 = vld [vmem:[#allocation3 + $0x8] sm:$0xff]
    %v523 = vld [vmem:[#allocation3 + $0x10] sm:$0xff]
    %v524 = vld [vmem:[#allocation3 + $0x18] sm:$0xff]
    %v525 = vld [vmem:[#allocation3 + $0x20] sm:$0xff]
    %v526 = vld [vmem:[#allocation3 + $0x28] sm:$0xff]
    %v527 = vld [vmem:[#allocation3 + $0x30] sm:$0xff]
    %v528 = vld [vmem:[#allocation3 + $0x38] sm:$0xff]
    %v529 = vld [vmem:[#allocation3 + $0x40] sm:$0xff]
    %v530 = vld [vmem:[#allocation3 + $0x48] sm:$0xff]
    %v531 = vld [vmem:[#allocation3 + $0x50] sm:$0xff]
    %v532 = vld [vmem:[#allocation3 + $0x58] sm:$0xff]
    %v533 = vld [vmem:[#allocation3 + $0x60] sm:$0xff]
    %v534 = vld [vmem:[#allocation3 + $0x68] sm:$0xff]
    %v535 = vld [vmem:[#allocation3 + $0x70] sm:$0xff]
    %v536 = vld [vmem:[#allocation3 + $0x78] sm:$0xff]
    %v537 = vld [vmem:[#allocation3 + $0x80] sm:$0xff]
    %v538 = vld [vmem:[#allocation3 + $0x88] sm:$0xff]
    %v539 = vld [vmem:[#allocation3 + $0x90] sm:$0xff]
    %v540 = vld [vmem:[#allocation3 + $0x98] sm:$0xff]
    %v541 = vld [vmem:[#allocation3 + $0xa0] sm:$0xff]
    %v542 = vld [vmem:[#allocation3 + $0xa8] sm:$0xff]
    %v543 = vld [vmem:[#allocation3 + $0xb0] sm:$0xff]
    %v544 = vld [vmem:[#allocation3 + $0xb8] sm:$0xff]
    %v545 = vld [vmem:[#allocation3 + $0xc0] sm:$0xff]
    %v546 = vld [vmem:[#allocation3 + $0xc8] sm:$0xff]
    %v547 = vld [vmem:[#allocation3 + $0xd0] sm:$0xff]
    %v548 = vld [vmem:[#allocation3 + $0xd8] sm:$0xff]
    %v549 = vld [vmem:[#allocation3 + $0xe0] sm:$0xff]
    %v550 = vld [vmem:[#allocation3 + $0xe8] sm:$0xff]
    %v551 = vld [vmem:[#allocation3 + $0xf0] sm:$0xff]
    %v552 = vld [vmem:[#allocation3 + $0xf8] sm:$0xff]
    %553 = vmatprep.subr.mxu0 0.0
    %554 = vmatpush1.msra.mxu0 %v521
    %555 = vmatprep.subr.mxu0 0.0
    %556 = vmatpush1.msra.mxu0 %v522
    %557 = vmatprep.subr.mxu0 0.0
    %558 = vmatpush1.msra.mxu0 %v523
    %559 = vmatprep.subr.mxu0 0.0
    %560 = vmatpush1.msra.mxu0 %v524
    %561 = vmatprep.subr.mxu0 0.0
    %562 = vmatpush1.msra.mxu0 %v525
    %563 = vmatprep.subr.mxu0 0.0
    %564 = vmatpush1.msra.mxu0 %v526
    %565 = vmatprep.subr.mxu0 0.0
    %566 = vmatpush1.msra.mxu0 %v527
    %567 = vmatprep.subr.mxu0 0.0
    %568 = vmatpush1.msra.mxu0 %v528
    %569 = vmatprep.subr.mxu0 0.0
    %570 = vmatpush1.msra.mxu0 %v529
    %571 = vmatprep.subr.mxu0 0.0
    %572 = vmatpush1.msra.mxu0 %v530
    %573 = vmatprep.subr.mxu0 0.0
    %574 = vmatpush1.msra.mxu0 %v531
    %575 = vmatprep.subr.mxu0 0.0
    %576 = vmatpush1.msra.mxu0 %v532
    %577 = vmatprep.subr.mxu0 0.0
    %578 = vmatpush1.msra.mxu0 %v533
    %579 = vmatprep.subr.mxu0 0.0
    %580 = vmatpush1.msra.mxu0 %v534
    %581 = vmatprep.subr.mxu0 0.0
    %582 = vmatpush1.msra.mxu0 %v535
    %583 = vmatprep.subr.mxu0 0.0
    %584 = vmatpush1.msra.mxu0 %v536
    %585 = vmatprep.subr.mxu0 0.0
    %586 = vmatpush1.msra.mxu0 %v537
    %587 = vmatprep.subr.mxu0 0.0
    %588 = vmatpush1.msra.mxu0 %v538
    %589 = vmatprep.subr.mxu0 0.0
    %590 = vmatpush1.msra.mxu0 %v539
    %591 = vmatprep.subr.mxu0 0.0
    %592 = vmatpush1.msra.mxu0 %v540
    %593 = vmatprep.subr.mxu0 0.0
    %594 = vmatpush1.msra.mxu0 %v541
    %595 = vmatprep.subr.mxu0 0.0
    %596 = vmatpush1.msra.mxu0 %v542
    %597 = vmatprep.subr.mxu0 0.0
    %598 = vmatpush1.msra.mxu0 %v543
    %599 = vmatprep.subr.mxu0 0.0
    %600 = vmatpush1.msra.mxu0 %v544
    %601 = vmatprep.subr.mxu0 0.0
    %602 = vmatpush1.msra.mxu0 %v545
    %603 = vmatprep.subr.mxu0 0.0
    %604 = vmatpush1.msra.mxu0 %v546
    %605 = vmatprep.subr.mxu0 0.0
    %606 = vmatpush1.msra.mxu0 %v547
    %607 = vmatprep.subr.mxu0 0.0
    %608 = vmatpush1.msra.mxu0 %v548
    %609 = vmatprep.subr.mxu0 0.0
    %610 = vmatpush1.msra.mxu0 %v549
    %611 = vmatprep.subr.mxu0 0.0
    %612 = vmatpush1.msra.mxu0 %v550
    %613 = vmatprep.subr.mxu0 0.0
    %614 = vmatpush1.msra.mxu0 %v551
    %615 = vmatprep.subr.mxu0 0.0
    %616 = vmatpush1.msra.mxu0 %v552
    %617 = vmatprep.mubr.f32.mxu0 %v517
    %618 = vmatmul.mubr.f32.gmra.mrb[0].mxu0 %v516
    %v619 = vpop.f32.mrb[0].mxu0
    %v620 = vadd.f32 0.0, %v619
    %v621 = vpop.f32.mrb[0].mxu0
    %622 = vdwg.mxu0
    %v623 = vrot.slane %v620, 4
    %v624 = vadd.f32 %v620, %v623
    %v625 = vrot.slane %v624, 2
    %v626 = vadd.f32 %v624, %v625
    %v627 = vrot.slane %v626, 1
    %v628 = vadd.f32 %v626, %v627
    %v629 = vmul.f32 %v620, %v620
    %v630 = vrot.slane %v629, 4
    %v631 = vadd.f32 %v629, %v630
    %v632 = vrot.slane %v631, 2
    %v633 = vadd.f32 %v631, %v632
    %v634 = vrot.slane %v633, 1
    %v635 = vadd.f32 %v633, %v634
    %v636 = vmul.f32 %v628, 0.125
    %v637 = vmul.f32 %v635, 0.125
    %v638 = vmul.f32 %v636, %v636
    %v639 = vsub.f32 %v637, %v638
    %v640 = vmax.f32 %v639, 0.0
    %v641 = vsub.f32 %v620, %v636
    %v642 = vadd.f32 %v640, 1e-05
    %v643 = vrsqrt.pop %v642
    %v644 = vmul.f32 %v641, %v643
    %v645 = vmul.f32 %v644, 0.01
    %v646 = vmax.f32 %v644, %v645
    %s647 = sld [smem:[#allocation5]]
    %v648 = vld [vmem:[%s6] sm:$0x1]
    %v650 = vlaneseq
    %v651 = vshrl.u32 %v650, 7
    %v652 = vsub.s32 0, %v651
    %v653 = vrot.slane %v648, %v652
    %v655 = vmul.f32 %v646, %v653
    %656 = vadd.xlane.f32.xlu0 %v655
    %v657 = vpop.xlane.xlu0 %656
    %v658 = vstv %s647
    %v659 = vadd.f32 %v657, %v658
    %vm660 = vcmask 7168
    %661 = vst.msk [vmem:[%s8] sm:$0xff] %vm660, %v659
    // Predicated region
    $region38: #{tpu_custom_call.1} parent=1 // pred_check
      _
    $region39: #{tpu_custom_call.1} parent=1 // pred_check_branch
      %663 = sbr.rel (0) target = $region41
    $region40: #{tpu_custom_call.1} parent=1 // pred_region
      _
    $region41: #{tpu_custom_call.1} parent=1 // pred_fallthru
      _
    // Predicated region
    $region42: #{tpu_custom_call.1} parent=1 // pred_check
      _
    $region43: #{tpu_custom_call.1} parent=1 // pred_check_branch
      %665 = sbr.rel (0) target = $region45
    $region44: #{tpu_custom_call.1} parent=1 // pred_region
      _
    $region45: #{tpu_custom_call.1} parent=1 // pred_fallthru
      _
    %666 = vsyncpa [#allocation7], 1
  %667 = vsyncmov [#allocation4]
  %s668 = vpop.sfrf %667
  %p669 = scmp.eq.s32.totalorder %s668, 0
  %p670 = pneg %p669
  %672 = shalt.err (%p670)
  %s673 = scalar_lea.sflag [#allocation4], 1
  %674 = vsyncmov %s673
  %s675 = vpop.sfrf %674
  %p676 = scmp.eq.s32.totalorder %s675, 0
  %p677 = pneg %p676
  %679 = shalt.err (%p677)

</llo_original>
